<compile_context>
chip_gen: v6e
topology: v6e:2x2x1
jax: 0.10.0
libtpu: 0.0.40
codegen_flags: <defaults>
</compile_context>

<pallas_src>
import functools

import jax
import jax.numpy as jnp
from jax.experimental import pallas as pl
from jax.experimental.pallas import tpu as pltpu

LANES = 128
BLOCK_BYTES = 4 << 20   # 4 MiB per input buffer (double-buffered by Pallas)
NUM_SPLITS = 2          # leading 'parallel' grid axis: 2 TCs on v7x, harmless on 1-TC chips


def _round_up(x, m):
    return (x + m - 1) // m * m


def _cdiv(a, b):
    return -(-a // b)


def _per_element(p, target, ls_gan):
    """Elementwise GAN loss term in f32 (PyTorch MSELoss / BCELoss semantics)."""
    if ls_gan:
        d = p - target
        return d * d
    # PyTorch BCELoss clamps the log terms at -100.
    if target == 1.0:
        return -jnp.maximum(jnp.log(p), -100.0)
    if target == 0.0:
        return -jnp.maximum(jnp.log(1.0 - p), -100.0)
    return -(target * jnp.maximum(jnp.log(p), -100.0)
             + (1.0 - target) * jnp.maximum(jnp.log(1.0 - p), -100.0))


def _gan_loss_kernel(pred_ref, out_ref, *, steps_per_core, num_blocks,
                     block_rows, last_block_rows, ls_gan, target):
    c = pl.program_id(0)   # 'parallel' core-split axis
    i = pl.program_id(1)   # 'arbitrary' reduction axis

    # Per-core partial-sum accumulator lives in the resident output block.
    @pl.when(i == 0)
    def _():
        out_ref[...] = jnp.zeros_like(out_ref)

    gblk = c * steps_per_core + i   # global block index handled by this step

    def accumulate(per):
        # (block_rows,128) -> (8,128): tile-aligned reshape + pure vreg-wise VALU
        # adds (1 add per input vreg), no cross-lane work, no per-vreg acc traffic.
        out_ref[...] += per.reshape(block_rows // 8, 8, LANES).sum(axis=0)

    ragged = last_block_rows < block_rows   # static

    if ragged:
        # Hot path: full in-range blocks, no masking.
        @pl.when(gblk < num_blocks - 1)
        def _():
            accumulate(_per_element(pred_ref[...].astype(jnp.float32),
                                    target, ls_gan))

        # Last (row-ragged) block: mask the input BEFORE the loss math so no
        # log(garbage) NaN/Inf is ever formed, then zero invalid rows (select).
        @pl.when(gblk == num_blocks - 1)
        def _():
            p = pred_ref[...].astype(jnp.float32)
            row = jax.lax.broadcasted_iota(jnp.int32, p.shape, 0)
            valid = row < last_block_rows
            p = jnp.where(valid, p, jnp.float32(0.5))
            accumulate(jnp.where(valid, _per_element(p, target, ls_gan), 0.0))
    else:
        @pl.when(gblk < num_blocks)
        def _():
            accumulate(_per_element(pred_ref[...].astype(jnp.float32),
                                    target, ls_gan))


def gan_loss(prediction, target_label_value=1.0, ls_gan=True, *,
             block_bytes=BLOCK_BYTES):
    """Pallas equivalent of GANLoss.forward(prediction, target_label_value)."""
    target = float(target_label_value)
    ls_gan = bool(ls_gan)
    n = prediction.size
    itemsize = prediction.dtype.itemsize

    flat = prediction.reshape(-1)   # free for contiguous inputs
    tail = n % LANES
    n_main = n - tail

    # <=127-element ragged tail: plain JAX (reads only the tail), folded into the mean.
    tail_sum = jnp.float32(0.0)
    if tail:
        tail_sum = jnp.sum(_per_element(flat[n_main:].astype(jnp.float32),
                                        target, ls_gan))

    if n_main == 0:
        return tail_sum / jnp.float32(n)

    if tail:
        # TODO(synk): this prefix slice still costs one HBM copy of the main part
        # when numel % 128 != 0; a fully zero-copy path needs a 1-D BlockSpec +
        # in-kernel reshape, not used here for lowering safety.
        main = flat[:n_main]
    else:
        main = flat

    rows = n_main // LANES
    x2d = main.reshape(rows, LANES)

    # Dtype-native sublane pack: 8 (f32), 16 (bf16), 32 (int8/fp8).
    pack = max(8, 32 // itemsize)
    max_block_rows = max(pack, (block_bytes // (LANES * itemsize)) // pack * pack)
    block_rows = min(max_block_rows, _round_up(rows, pack))
    num_blocks = _cdiv(rows, block_rows)
    steps_per_core = _cdiv(num_blocks, NUM_SPLITS)
    last_block_rows = rows - (num_blocks - 1) * block_rows
    block_bytes_actual = block_rows * LANES * itemsize

    kernel = functools.partial(
        _gan_loss_kernel,
        steps_per_core=steps_per_core,
        num_blocks=num_blocks,
        block_rows=block_rows,
        last_block_rows=last_block_rows,
        ls_gan=ls_gan,
        target=target,
    )

    def in_map(c, i):
        # Clamp so inactive steps (only when num_blocks is odd) re-point at the
        # last valid block (Pallas skips the re-fetch; compute is pl.when-gated).
        return (jnp.minimum(c * steps_per_core + i, num_blocks - 1), 0)

    if ls_gan:
        flops, transc = 3 * n, 0
    else:
        flops = 5 * n
        transc = n if target in (0.0, 1.0) else 2 * n

    partials = pl.pallas_call(
        kernel,
        out_shape=jax.ShapeDtypeStruct((NUM_SPLITS * 8, LANES), jnp.float32),
        grid_spec=pltpu.PrefetchScalarGridSpec(
            num_scalar_prefetch=0,
            grid=(NUM_SPLITS, steps_per_core),
            in_specs=[pl.BlockSpec((block_rows, LANES), in_map)],
            out_specs=pl.BlockSpec((8, LANES), lambda c, i: (c, 0)),
        ),
        compiler_params=pltpu.CompilerParams(
            dimension_semantics=("parallel", "arbitrary"),
            vmem_limit_bytes=int(2 * block_bytes_actual + (8 << 20)),
        ),
        cost_estimate=pl.CostEstimate(
            flops=int(flops),
            transcendentals=int(transc),
            bytes_accessed=int(n_main * itemsize + NUM_SPLITS * 8 * LANES * 4),
        ),
    )(x2d)

    total = jnp.sum(partials) + tail_sum
    return total / jnp.float32(n)


if __name__ == "__main__":
    key = jax.random.PRNGKey(0)
    k1, k2, k3, k4 = jax.random.split(key, 4)

    # 1) Small discriminator-like output, NCHW. MSE (ls_gan=True) vs target 1.0.
    pred = jax.random.uniform(k1, (2, 4, 16, 16), dtype=jnp.float32,
                              minval=0.01, maxval=0.99)
    loss = gan_loss(pred, target_label_value=1.0, ls_gan=True)
    jax.block_until_ready(loss)
    ref = jnp.mean((pred - 1.0) ** 2)
    assert jnp.allclose(loss, ref, rtol=1e-5, atol=1e-6), (loss, ref)

    # 2) BCE (ls_gan=False) vs target 0.0 on the same prediction.
    loss_bce = gan_loss(pred, target_label_value=0.0, ls_gan=False)
    jax.block_until_ready(loss_bce)
    ref_bce = jnp.mean(-jnp.log(1.0 - pred))
    assert jnp.allclose(loss_bce, ref_bce, rtol=1e-4, atol=1e-5), (loss_bce, ref_bce)

    # 3a) Multi-block grid + ragged last block + 2-way core split (small block
    #     override keeps the test tensor small while exercising the tiling).
    pred_mb = jax.random.uniform(k2, (2, 4, 30, 32), dtype=jnp.float32,
                                 minval=0.01, maxval=0.99)
    loss_mb = gan_loss(pred_mb, target_label_value=1.0, ls_gan=True,
                       block_bytes=8 * 1024)
    jax.block_until_ready(loss_mb)
    ref_mb = jnp.mean((pred_mb - 1.0) ** 2)
    assert jnp.allclose(loss_mb, ref_mb, rtol=1e-5, atol=1e-6), (loss_mb, ref_mb)

    # 3b) Odd block count (one clamped/inactive grid step on the second split).
    pred_odd_blocks = jax.random.uniform(k3, (4, 8, 20, 16), dtype=jnp.float32,
                                         minval=0.01, maxval=0.99)
    loss_ob = gan_loss(pred_odd_blocks, target_label_value=0.9, ls_gan=True,
                       block_bytes=8 * 1024)
    jax.block_until_ready(loss_ob)
    ref_ob = jnp.mean((pred_odd_blocks - 0.9) ** 2)
    assert jnp.allclose(loss_ob, ref_ob, rtol=1e-5, atol=1e-6), (loss_ob, ref_ob)

    # 4) numel not divisible by 128 (wrapper tail + in-kernel row mask), BCE vs 1.0.
    pred_tail = jax.random.uniform(k4, (3, 5, 7, 9), dtype=jnp.float32,
                                   minval=0.01, maxval=0.99)
    loss_tail = gan_loss(pred_tail, target_label_value=1.0, ls_gan=False)
    jax.block_until_ready(loss_tail)
    ref_tail = jnp.mean(-jnp.log(pred_tail))
    assert jnp.allclose(loss_tail, ref_tail, rtol=1e-4, atol=1e-5), (loss_tail, ref_tail)

    # 5) bf16 input stays bf16 across HBM; upcast happens in-kernel.
    pred_bf16 = pred.astype(jnp.bfloat16)
    loss_bf16 = gan_loss(pred_bf16, target_label_value=1.0, ls_gan=True)
    jax.block_until_ready(loss_bf16)
    ref_bf16 = jnp.mean((pred_bf16.astype(jnp.float32) - 1.0) ** 2)
    assert jnp.allclose(loss_bf16, ref_bf16, rtol=1e-5, atol=1e-6), (loss_bf16, ref_bf16)

    # 6) General BCE target (label smoothing style, both log terms).
    loss_gen = gan_loss(pred, target_label_value=0.3, ls_gan=False)
    jax.block_until_ready(loss_gen)
    ref_gen = jnp.mean(-(0.3 * jnp.log(pred) + 0.7 * jnp.log(1.0 - pred)))
    assert jnp.allclose(loss_gen, ref_gen, rtol=1e-4, atol=1e-5), (loss_gen, ref_gen)

    print("KERNEL_OK")
</pallas_src>

<mosaic_0001>
module attributes {stable_mosaic.version = 11 : i64} {
  func.func @_gan_loss_kernel(%arg0: i32, %arg1: i32, %arg2: memref<16x128xf32, #tpu.memory_space<vmem>>, %arg3: memref<8x128xf32, #tpu.memory_space<vmem>>) attributes {dimension_semantics = [#tpu.dimension_semantics<parallel>, #tpu.dimension_semantics<arbitrary>], iteration_bounds = array<i64: 2, 1>, scalar_prefetch = 0 : i64, scratch_operands = 0 : i64, tpu.core_type = #tpu.core_type<tc>, window_params = [{transform_indices = @transform_0, window_bounds = array<i64: 16, 128>}, {transform_indices = @transform_1, window_bounds = array<i64: 8, 128>}]} {
    %c0_i32 = arith.constant 0 : i32
    %0 = arith.cmpi eq, %arg1, %c0_i32 : i32
    %1 = arith.extui %0 : i1 to i32
    %c0_i32_0 = arith.constant 0 : i32
    %2 = arith.cmpi ne, %1, %c0_i32_0 : i32
    scf.if %2 {
      %cst = arith.constant 0.000000e+00 : f32
      %8 = vector.broadcast %cst : f32 to vector<8x128xf32>
      %c0 = arith.constant 0 : index
      %c0_3 = arith.constant 0 : index
      %9 = vector.load %arg3[%c0, %c0_3] : memref<8x128xf32, #tpu.memory_space<vmem>>, vector<8x128xf32>
      tpu.vector_store %arg3[%c0, %c0_3], %8 {strides = array<i32>} : memref<8x128xf32, #tpu.memory_space<vmem>>, vector<8x128xf32>,
    } else {
    }
    %c1_i32 = arith.constant 1 : i32
    %3 = arith.muli %arg0, %c1_i32 : i32
    %4 = arith.addi %3, %arg1 : i32
    %c1_i32_1 = arith.constant 1 : i32
    %5 = arith.cmpi slt, %4, %c1_i32_1 : i32
    %6 = arith.extui %5 : i1 to i32
    %c0_i32_2 = arith.constant 0 : i32
    %7 = arith.cmpi ne, %6, %c0_i32_2 : i32
    scf.if %7 {
      %c0 = arith.constant 0 : index
      %c0_3 = arith.constant 0 : index
      %8 = vector.load %arg2[%c0, %c0_3] : memref<16x128xf32, #tpu.memory_space<vmem>>, vector<16x128xf32>
      %cst = arith.constant 1.000000e+00 : f32
      %9 = vector.broadcast %cst : f32 to vector<16x128xf32>
      %10 = arith.subf %8, %9 : vector<16x128xf32>
      %11 = arith.mulf %10, %10 : vector<16x128xf32>
      %c0_4 = arith.constant 0 : index
      %c0_5 = arith.constant 0 : index
      %12 = vector.load %arg3[%c0_4, %c0_5] : memref<8x128xf32, #tpu.memory_space<vmem>>, vector<8x128xf32>
      %13 = vector.shape_cast %11 : vector<16x128xf32> to vector<2x8x128xf32>
      %cst_6 = arith.constant dense<0.000000e+00> : vector<8x128xf32>
      %14 = vector.multi_reduction <add>, %13, %cst_6 [0] : vector<2x8x128xf32> to vector<8x128xf32>
      %15 = arith.addf %12, %14 : vector<8x128xf32>
      %c0_7 = arith.constant 0 : index
      %c0_8 = arith.constant 0 : index
      %16 = vector.load %arg3[%c0_7, %c0_8] : memref<8x128xf32, #tpu.memory_space<vmem>>, vector<8x128xf32>
      tpu.vector_store %arg3[%c0_7, %c0_8], %15 {strides = array<i32>} : memref<8x128xf32, #tpu.memory_space<vmem>>, vector<8x128xf32>,
    } else {
    }
    return
  }
  func.func @transform_0(%arg0: i32, %arg1: i32) -> (i32, i32) {
    %c1_i32 = arith.constant 1 : i32
    %0 = arith.muli %arg0, %c1_i32 : i32
    %1 = arith.addi %0, %arg1 : i32
    %c0_i32 = arith.constant 0 : i32
    %2 = arith.minsi %1, %c0_i32 : i32
    %c0_i32_0 = arith.constant 0 : i32
    %c0_i32_1 = arith.constant 0 : i32
    return %2, %c0_i32_0 : i32, i32
  }
  func.func @transform_1(%arg0: i32, %arg1: i32) -> (i32, i32) {
    %c0_i32 = arith.constant 0 : i32
    %c0_i32_0 = arith.constant 0 : i32
    return %arg0, %c0_i32 : i32, i32
  }
}

</mosaic_0001>

<llo_original>
// kernel: tpu_custom_call.1
$region0: #{tpu_custom_call.1}
  #allocation0 [shape = 'u32[]', space=smem, size = 0x4, offset = 0x4, fixed_abs, tag = 'smem constant byte address 0x4 - core index']
  #allocation1 [shape = 'u32[144,128]{1,0:T(1,128)}', space=vmem, size = 0x12000, scoped, tag = 'internal scratch']
  %s0 = inlined_call_operand.hbm [shape: f32[16,128], index: 0, kind: input, shape index: {}]
  %s1 = inlined_call_operand.hbm [shape: f32[16,128], index: 1, kind: output, shape index: {}]
  %s2 = sld [smem:[#allocation0]]
  $region49: #{tpu_custom_call.1} parent=0
    _
  %s4 = ssub.s32 1, %s2
  %s5 = scalar_select 0, %s4, %s2
  $region1: #{tpu_custom_call.1} parent=0
    #allocation2 [shape = 'u8[16384]{0}', space=vmem, size = 0x4000, scoped, tag = 'input window, operand 0']
    #allocation3 [shape = 's32[2]{0}', space=sflag, size = 0x8, scoped, tag = 'scoped memory for tpu_custom_call.1']
    #allocation4 [shape = 's32[2]{0}', space=sflag, size = 0x8, scoped, tag = 'scoped memory for tpu_custom_call.1']
    #allocation5 [shape = 'u8[8192]{0}', space=vmem, size = 0x2000, scoped, tag = 'output window, operand 0']
    %6 = vsyncpa [#allocation3], 0
    %s7 = scalar_lea.sflag [#allocation3], 1
    %8 = vsyncpa %s7, 0
    %9 = vsyncpa [#allocation4], 0
    %s10 = scalar_lea.sflag [#allocation4], 1
    %11 = vsyncpa %s10, 0
    loop: start=0, step=1, limit=4
    $region2: #{tpu_custom_call.1} parent=1 // loop_pre_header
      _
    $region3: #{tpu_custom_call.1} parent=1 // loop_header
      %s13 = sphi 0, %s17
      %p14 = scmp.ge.s32.totalorder %s13, 4
      %s20 = sphi 0, %s32
      %s21 = sphi 0, %s28
      %s22 = sphi 0, %s20
      %s23 = sphi 0, %s21
      %s24 = sphi 0, %s22
      %s25 = sphi 0, %s23
      %s41 = sphi 0, %s43
      %s44 = sphi 0, %s41
      %s45 = sphi 0, %s44
      %s61 = sphi 0, %s45
      %s67 = sphi 0, %s69
      %s70 = sphi 0, %s67
      %s71 = sphi 0, %s70
      %s87 = sphi 0, %s71
    $region4: #{tpu_custom_call.1} parent=1 // loop_header_branch
      %16 = sbr.rel (%p14) target = $region8
    $region5: #{tpu_custom_call.1} parent=1 // loop_body
      %s18 = ssub.s32 %s13, 1
      %s19 = ssub.s32 %s13, 2
      %s26 = sadd.s32 1, %s21
      %p27 = scmp.ge.s32.totalorder %s26, 1
      %s28 = scalar_select %p27, 0, %s26
      %s29 = sadd.s32 1, %s20
      %s30 = scalar_select %p27, %s29, %s20
      %p31 = scmp.ge.s32.totalorder %s30, 2
      %s32 = scalar_select %p31, 0, %s30
      %s33 = sadd.s32 %s20, %s21
      %p34 = scmp.lt.s32.totalorder %s33, 0
      %s35 = scalar_select %p34, %s33, 0
      %s36 = sadd.s32 %s32, %s28
      %p37 = scmp.lt.s32.totalorder %s36, 0
      %s38 = scalar_select %p37, %s36, 0
      %s39 = ssub.s32 %s35, %s38
      %p40 = scmp.eq.s32.totalorder %s39, 0
      %s42 = sadd.s32 %s41, 1
      %s43 = scalar_select %p40, %s41, %s42
      %p46 = pneg %p40
      %p47 = scmp.eq.s32.totalorder %s13, 1
      %p48 = por %p46, %p47
      %p49 = scmp.ne.s32.totalorder %s41, %s44
      %p50 = scmp.eq.s32.totalorder %s13, 0
      %p51 = por %p49, %p50
      %p52 = scmp.ne.s32.totalorder %s41, %s44
      %p53 = scmp.eq.s32.totalorder %s18, 1
      %p54 = por %p52, %p53
      %p55 = scmp.ne.s32.totalorder %s44, %s45
      %p56 = scmp.eq.s32.totalorder %s18, 0
      %p57 = por %p55, %p56
      %p58 = scmp.ne.s32.totalorder %s44, %s45
      %p59 = scmp.eq.s32.totalorder %s19, 1
      %p60 = por %p58, %p59
      %p62 = scmp.ne.s32.totalorder %s45, %s61
      %p63 = scmp.eq.s32.totalorder %s19, 0
      %p64 = por %p62, %p63
      %s65 = ssub.s32 %s20, %s32
      %p66 = scmp.eq.s32.totalorder %s65, 0
      %s68 = sadd.s32 %s67, 1
      %s69 = scalar_select %p66, %s67, %s68
      %p72 = pneg %p66
      %p73 = scmp.eq.s32.totalorder %s13, 1
      %p74 = por %p72, %p73
      %p75 = scmp.ne.s32.totalorder %s67, %s70
      %p76 = scmp.eq.s32.totalorder %s13, 0
      %p77 = por %p75, %p76
      %p78 = scmp.ne.s32.totalorder %s67, %s70
      %p79 = scmp.eq.s32.totalorder %s18, 1
      %p80 = por %p78, %p79
      %p81 = scmp.ne.s32.totalorder %s70, %s71
      %p82 = scmp.eq.s32.totalorder %s18, 0
      %p83 = por %p81, %p82
      %p84 = scmp.ne.s32.totalorder %s70, %s71
      %p85 = scmp.eq.s32.totalorder %s19, 1
      %p86 = por %p84, %p85
      %p88 = scmp.ne.s32.totalorder %s71, %s87
      %p89 = scmp.eq.s32.totalorder %s19, 0
      %p90 = por %p88, %p89
      %p91 = scmp.le.s32.totalorder 1, %s13
      %p92 = scmp.lt.s32.totalorder %s13, 3
      %p93 = pnand %p91, %p92
      %p94 = pneg %p93
      // Predicated region
      $region9: #{tpu_custom_call.1} parent=5 // pred_check
        _
      $region10: #{tpu_custom_call.1} parent=5 // pred_check_branch
        %96 = sbr.rel (%p93) target = $region12
      $region11: #{tpu_custom_call.1} parent=5 // pred_region
        %s97 = ssub.s32 %s13, 1
      $region12: #{tpu_custom_call.1} parent=5 // pred_fallthru
        _
      %p98 = scmp.lt.s32.totalorder %s13, 2
      // Predicated region
      $region13: #{tpu_custom_call.1} parent=5 // pred_check
        %p99 = pneg %p98
      $region14: #{tpu_custom_call.1} parent=5 // pred_check_branch
        %101 = sbr.rel (%p99) target = $region16
      $region15: #{tpu_custom_call.1} parent=5 // pred_region
        // Predicated region
        $region17: #{tpu_custom_call.1} parent=15 // pred_check
          %p102 = pneg %p51
        $region18: #{tpu_custom_call.1} parent=15 // pred_check_branch
          %104 = sbr.rel (%p102) target = $region20
        $region19: #{tpu_custom_call.1} parent=15 // pred_region
          %s105 = sand.u32 %s41, 1
          %s106 = scalar_lea.sflag [#allocation3], %s105
          %s107 = sand.u32 %s41, 1
          %s108 = smul.addr %s107, 16
          %s109 = scalar_lea.vmem [#allocation2], %s108
          %s110 = sadd.s32 %s20, %s21
          %p111 = scmp.lt.s32.totalorder %s110, 0
          %s112 = scalar_select %p111, %s110, 0
          %s113 = smul.u32 2, %s112
          %s115 = ssub.s32 256, 256
          %116 = vsyncadd %s106, %s115
          %s117 = smul.addr %s113, 128
          %s118 = scalar_lea.hbm %s0, %s117
          %s119 = sshll.u32 %s109, 4
          %s120 = int_to_ptr.vmem [resolvable:$true] %s119
          %125 = dma.hbm_to_vmem [thread:$0]  %s118, 256, %s120, %s106, 128, 128, 8
        $region20: #{tpu_custom_call.1} parent=15 // pred_fallthru
          _
      $region16: #{tpu_custom_call.1} parent=5 // pred_fallthru
        _
      %p126 = scmp.le.s32.totalorder 1, %s13
      %p127 = scmp.lt.s32.totalorder %s13, 3
      %p128 = pnand %p126, %p127
      %p129 = pneg %p128
      // Predicated region
      $region21: #{tpu_custom_call.1} parent=5 // pred_check
        _
      $region22: #{tpu_custom_call.1} parent=5 // pred_check_branch
        %131 = sbr.rel (%p128) target = $region24
      $region23: #{tpu_custom_call.1} parent=5 // pred_region
        %s132 = ssub.s32 %s13, 1
        %s133 = sand.u32 %s44, 1
        %s134 = scalar_lea.sflag [#allocation3], %s133
        %s135 = sand.u32 %s44, 1
        %s136 = smul.addr %s135, 16
        %s137 = scalar_lea.vmem [#allocation2], %s136
        // Predicated region
        $region25: #{tpu_custom_call.1} parent=23 // pred_check
          %p138 = pneg %p57
        $region26: #{tpu_custom_call.1} parent=23 // pred_check_branch
          %140 = sbr.rel (%p138) target = $region28
        $region27: #{tpu_custom_call.1} parent=23 // pred_region
          %141 = dma.done %s134, 256
        $region28: #{tpu_custom_call.1} parent=23 // pred_fallthru
          _
        %s142 = sand.u32 %s44, 1
        %s143 = scalar_lea.sflag [#allocation3], %s142
        %s144 = sand.u32 %s44, 1
        %s145 = smul.addr %s144, 16
        %s146 = scalar_lea.vmem [#allocation2], %s145
        %p147 = pneg %p57
        %p148 = pneg %p54
        %p149 = pneg %p83
        %p150 = pneg %p80
        %s151 = sand.u32 %s70, 1
        %s152 = scalar_lea.sflag [#allocation4], %s151
        %s153 = sand.u32 %s70, 1
        %s154 = smul.addr %s153, 8
        %s155 = scalar_lea.vmem [#allocation5], %s154
        %s156 = sadd.s32 %s22, %s23
        %p157 = scmp.lt.s32.totalorder %s156, 0
        %s158 = scalar_select %p157, %s156, 0
        %s159 = smul.u32 2, %s158
        %p160 = scmp.eq.s32.totalorder %s23, 0
        // Predicated region
        $region29: #{tpu_custom_call.1} parent=23 // pred_check
          %p161 = pneg %p160
        $region30: #{tpu_custom_call.1} parent=23 // pred_check_branch
          %163 = sbr.rel (%p161) target = $region32
        $region31: #{tpu_custom_call.1} parent=23 // pred_region
          %164 = vst [vmem:[%s155] sm:$0xff] 0.0
        $region32: #{tpu_custom_call.1} parent=23 // pred_fallthru
          _
        %s165 = sadd.s32 %s22, %s23
        %p166 = scmp.lt.s32.totalorder %s165, 1
        // Predicated region
        $region33: #{tpu_custom_call.1} parent=23 // pred_check
          %p167 = pneg %p166
        $region34: #{tpu_custom_call.1} parent=23 // pred_check_branch
          %169 = sbr.rel (%p167) target = $region36
        $region35: #{tpu_custom_call.1} parent=23 // pred_region
          %v170 = vld [vmem:[%s137] sm:$0xff]
          %v171 = vld [vmem:[%s137 + $0x8] sm:$0xff]
          %v172 = vsub.f32 %v170, 1.0
          %v173 = vsub.f32 %v171, 1.0
          %v174 = vmul.f32 %v172, %v172
          %v175 = vmul.f32 %v173, %v173
          %v176 = vld [vmem:[%s155] sm:$0xff]
          %v177 = vadd.f32 %v174, %v175
          %v178 = vadd.f32 %v176, %v177
          %179 = vst [vmem:[%s155] sm:$0xff] %v178
        $region36: #{tpu_custom_call.1} parent=23 // pred_fallthru
          _
        %s180 = sand.u32 %s70, 1
        %s181 = scalar_lea.sflag [#allocation4], %s180
        %s182 = sand.u32 %s70, 1
        %s183 = smul.addr %s182, 8
        %s184 = scalar_lea.vmem [#allocation5], %s183
        // Predicated region
        $region37: #{tpu_custom_call.1} parent=23 // pred_check
          %p185 = pneg %p80
        $region38: #{tpu_custom_call.1} parent=23 // pred_check_branch
          %187 = sbr.rel (%p185) target = $region40
        $region39: #{tpu_custom_call.1} parent=23 // pred_region
          %s189 = ssub.s32 128, 128
          %190 = vsyncadd %s181, %s189
          %s191 = smul.addr %s22, 128
          %s192 = scalar_lea.hbm %s1, %s191
          %s194 = sshll.u32 %s184, 4
          %s195 = int_to_ptr.vmem [resolvable:$true] %s194
          %197 = dma.vmem_to_hbm [thread:$0]  %s195, 128, %s192, %s181
        $region40: #{tpu_custom_call.1} parent=23 // pred_fallthru
          _
      $region24: #{tpu_custom_call.1} parent=5 // pred_fallthru
        _
      %p198 = scmp.le.s32.totalorder 2, %s13
      // Predicated region
      $region41: #{tpu_custom_call.1} parent=5 // pred_check
        %p199 = pneg %p198
      $region42: #{tpu_custom_call.1} parent=5 // pred_check_branch
        %201 = sbr.rel (%p199) target = $region44
      $region43: #{tpu_custom_call.1} parent=5 // pred_region
        %s202 = ssub.s32 %s13, 2
        // Predicated region
        $region45: #{tpu_custom_call.1} parent=43 // pred_check
          %p203 = pneg %p86
        $region46: #{tpu_custom_call.1} parent=43 // pred_check_branch
          %205 = sbr.rel (%p203) target = $region48
        $region47: #{tpu_custom_call.1} parent=43 // pred_region
          %s206 = sand.u32 %s71, 1
          %s207 = scalar_lea.sflag [#allocation4], %s206
          %s208 = sand.u32 %s71, 1
          %s209 = smul.addr %s208, 8
          %s210 = scalar_lea.vmem [#allocation5], %s209
          %211 = dma.done %s207, 128
        $region48: #{tpu_custom_call.1} parent=43 // pred_fallthru
          _
      $region44: #{tpu_custom_call.1} parent=5 // pred_fallthru
        _
    $region6: #{tpu_custom_call.1} parent=1 // loop_footer
      %s17 = sadd.s32 1, %s13
    $region7: #{tpu_custom_call.1} parent=1 // loop_footer_branch
      %12 = sbr.rel target = $region3
    $region8: #{tpu_custom_call.1} parent=1 // loop_exit
      _
    %212 = vsyncpa [#allocation3], 1
    %s213 = scalar_lea.sflag [#allocation3], 1
    %214 = vsyncpa %s213, 1
    %215 = vsyncpa [#allocation4], 1
    %s216 = scalar_lea.sflag [#allocation4], 1
    %217 = vsyncpa %s216, 1

</llo_original>
